<compile_context>
chip_gen: v5e
topology: v5e:2x2
jax: 0.10.0
libtpu: 0.0.40
codegen_flags: <defaults>
</compile_context>

<pallas_src>
import functools

import jax
import jax.numpy as jnp
from jax import lax
from jax.experimental import pallas as pl
from jax.experimental.pallas import tpu as pltpu


def _round_up(x, m):
    return ((x + m - 1) // m) * m


def _vmem_capacity_bytes():
    """Generation-aware VMEM capacity; conservative 64 MiB fallback (v7x)."""
    try:
        info = pltpu.get_tpu_info()
        for name in ("vmem_capacity_bytes", "vmem_bytes", "vmem_size_bytes"):
            v = getattr(info, name, None)
            if v:
                return int(v)
    except Exception:
        pass
    return 64 * 2**20


def _dice_partial_kernel(pred_ref, tgt_ref, inter_ref, psum_ref, tsum_ref, *,
                         chunk, num_chunks, tail_block, tail_valid):
    """Accumulate lane-dense partial sums of p*t, p, t over one feature tile."""
    j = pl.program_id(1)  # feature-block reduction axis (last in grid)

    @pl.when(j == 0)
    def _():
        inter_ref[...] = jnp.zeros_like(inter_ref)
        psum_ref[...] = jnp.zeros_like(psum_ref)
        tsum_ref[...] = jnp.zeros_like(tsum_ref)

    rows = pred_ref.shape[0]

    def accumulate(masked):
        if masked:
            lane = lax.broadcasted_iota(jnp.int32, (rows, chunk), 1)

        def body(c, carry):
            ci, cp, ct = carry
            start = c * chunk
            if not isinstance(start, int):
                start = pl.multiple_of(start, chunk)
            p = pred_ref[:, pl.ds(start, chunk)].astype(jnp.float32)
            t = tgt_ref[:, pl.ds(start, chunk)].astype(jnp.float32)
            if masked:
                # Keep as a select (not multiply-by-mask): NaN/Inf garbage in
                # the boundary overhang must not propagate into the sums.
                valid = (start + lane) < tail_valid
                p = jnp.where(valid, p, 0.0)
                t = jnp.where(valid, t, 0.0)
            return ci + p * t, cp + p, ct + t

        zeros = jnp.zeros((rows, chunk), jnp.float32)
        if num_chunks <= 8:
            ci, cp, ct = zeros, zeros, zeros
            for c in range(num_chunks):
                ci, cp, ct = body(c, (ci, cp, ct))
        else:
            ci, cp, ct = lax.fori_loop(0, num_chunks, body,
                                       (zeros, zeros, zeros), unroll=4)

        # Single lane-dense VMEM accumulator update per tile; the output block
        # stays resident across the reduction axis.
        inter_ref[...] += ci
        psum_ref[...] += cp
        tsum_ref[...] += ct

    if tail_block is None:
        accumulate(False)                 # no ragged tail anywhere
    else:
        is_tail = j == tail_block

        @pl.when(jnp.logical_not(is_tail))
        def _():
            accumulate(False)             # clean path for all full blocks

        @pl.when(is_tail)
        def _():
            accumulate(True)              # masked path only for the tail block


@jax.jit
def dice_loss(pred, target):
    assert pred.shape == target.shape
    n = pred.shape[0]

    # PyTorch: pred.view(size, -1) — row-major flatten of all non-batch dims.
    pred_flat = pred.reshape(n, -1)
    tgt_flat = target.reshape(n, -1)
    f = pred_flat.shape[1]
    assert f < 2**31, "int32 lane-mask arithmetic requires per-row features < 2^31"

    # --- Sublane folding: with n < 8 a (n, tile) block fills only n of the 8
    # sublanes per vreg. Fold features into extra rows (free contiguous
    # reshape); row sums decompose exactly so the dice score is unchanged.
    fold = 1
    if n < 8 and f > 0:
        for k in range(min(8 // n, f), 0, -1):
            if f % k == 0 and f // k >= 128:
                fold = k
                break
    rows = n * fold
    f2 = f // fold
    pred2 = pred_flat.reshape(rows, f2)
    tgt2 = tgt_flat.reshape(rows, f2)

    # Degenerate tiny feature dim: pad the lane axis up to one vreg width.
    if f2 < 128:
        pred2 = jnp.pad(pred2, ((0, 0), (0, 128 - f2)))
        tgt2 = jnp.pad(tgt2, ((0, 0), (0, 128 - f2)))
        f2 = 128

    # --- Row tiling: row block of 8 keeps the (rows, chunk) register carries
    # at <= ~12 vregs regardless of batch size (no spills on any generation).
    rb = rows if rows <= 8 else 8
    num_row_blocks = pl.cdiv(rows, rb)

    # --- Lane-dense accumulator chunk: multiple of 128, at most 512.
    chunk = min(512, (f2 // 128) * 128)

    # --- Feature tile sized from detected VMEM capacity: 2 pipeline buffers x
    # (pred + target block) must fit in ~65% of VMEM; per-input block <= 16 MiB.
    vmem_cap = _vmem_capacity_bytes()
    p_item = pred.dtype.itemsize
    t_item = target.dtype.itemsize
    budget = int(0.65 * vmem_cap)
    tile_f = budget // (2 * rb * (p_item + t_item))
    tile_f = min(tile_f, (16 << 20) // (rb * max(p_item, t_item)))
    tile_f = min(tile_f, _round_up(f2, chunk))
    tile_f = max(chunk, (tile_f // chunk) * chunk)
    num_chunks = tile_f // chunk

    num_f_blocks = pl.cdiv(f2, tile_f)
    rem = f2 - (num_f_blocks - 1) * tile_f       # valid lanes in the last block
    tail_block = None if rem == tile_f else num_f_blocks - 1

    kernel = functools.partial(
        _dice_partial_kernel,
        chunk=chunk, num_chunks=num_chunks,
        tail_block=tail_block, tail_valid=rem)

    # Explicit VMEM limit: double-buffered input blocks + the 3 small lane-dense
    # output accumulators + margin for Mosaic internal scratch.
    in_block_bytes = rb * tile_f * (p_item + t_item)
    out_block_bytes = 3 * rb * chunk * 4
    vmem_limit = 2 * in_block_bytes + 2 * out_block_bytes + (4 << 20)
    vmem_limit = int(min(max(vmem_limit, 16 << 20), 100 << 20))

    out_shape = jax.ShapeDtypeStruct((num_row_blocks, rb, chunk), jnp.float32)
    out_spec = pl.BlockSpec((None, rb, chunk), lambda r, j: (r, 0, 0))
    in_spec = pl.BlockSpec((rb, tile_f), lambda r, j: (r, j))

    inter_p, psum_p, tsum_p = pl.pallas_call(
        kernel,
        out_shape=(out_shape, out_shape, out_shape),
        grid_spec=pltpu.PrefetchScalarGridSpec(
            num_scalar_prefetch=0,
            grid=(num_row_blocks, num_f_blocks),
            in_specs=[in_spec, in_spec],
            out_specs=(out_spec, out_spec, out_spec)),
        compiler_params=pltpu.CompilerParams(
            dimension_semantics=("parallel", "arbitrary"),
            vmem_limit_bytes=vmem_limit),
    )(pred2, tgt2)

    # Tiny epilogue: cross-lane reduce, drop row-block overhang, regroup folded
    # rows, then the exact PyTorch dice math (smooth = 1).
    inter = inter_p.reshape(num_row_blocks * rb, chunk)[:rows].sum(axis=1)
    psum = psum_p.reshape(num_row_blocks * rb, chunk)[:rows].sum(axis=1)
    tsum = tsum_p.reshape(num_row_blocks * rb, chunk)[:rows].sum(axis=1)
    inter = inter.reshape(n, fold).sum(axis=1)
    psum = psum.reshape(n, fold).sum(axis=1)
    tsum = tsum.reshape(n, fold).sum(axis=1)

    smooth = jnp.float32(1.0)
    dice = (2.0 * inter + smooth) / (psum + tsum + smooth)
    return 1.0 - jnp.sum(dice) / jnp.float32(n)


def _dice_loss_ref(pred, target):
    n = pred.shape[0]
    p = pred.reshape(n, -1).astype(jnp.float32)
    t = target.reshape(n, -1).astype(jnp.float32)
    smooth = 1.0
    inter = jnp.sum(p * t, axis=1)
    dice = (2.0 * inter + smooth) / (jnp.sum(p, axis=1) + jnp.sum(t, axis=1) + smooth)
    return 1.0 - jnp.sum(dice) / n


if __name__ == "__main__":
    key = jax.random.PRNGKey(0)
    k1, k2 = jax.random.split(key)
    # NCHW inputs, as a PyTorch segmentation head would produce.
    B, C, H, W = 2, 4, 16, 16
    pred = jax.nn.sigmoid(jax.random.normal(k1, (B, C, H, W), jnp.float32))
    target = (jax.random.uniform(k2, (B, C, H, W)) > 0.5).astype(jnp.float32)

    loss = dice_loss(pred, target)
    jax.block_until_ready(loss)

    ref = _dice_loss_ref(pred, target)
    assert jnp.allclose(loss, ref, rtol=1e-5, atol=1e-5), (loss, ref)
    print("KERNEL_OK")
</pallas_src>

<mosaic_0001>
module attributes {stable_mosaic.version = 11 : i64} {
  func.func @_dice_partial_kernel(%arg0: i32, %arg1: i32, %arg2: memref<8x256xf32, #tpu.memory_space<vmem>>, %arg3: memref<8x256xf32, #tpu.memory_space<vmem>>, %arg4: memref<1x8x256xf32, #tpu.memory_space<vmem>>, %arg5: memref<1x8x256xf32, #tpu.memory_space<vmem>>, %arg6: memref<1x8x256xf32, #tpu.memory_space<vmem>>) attributes {dimension_semantics = [#tpu.dimension_semantics<parallel>, #tpu.dimension_semantics<arbitrary>], iteration_bounds = array<i64: 1, 1>, scalar_prefetch = 0 : i64, scratch_operands = 0 : i64, tpu.core_type = #tpu.core_type<tc>, window_params = [{transform_indices = @transform_0, window_bounds = array<i64: 8, 256>}, {transform_indices = @transform_1, window_bounds = array<i64: 8, 256>}, {transform_indices = @transform_2, window_bounds = array<i64: 1, 8, 256>}, {transform_indices = @transform_3, window_bounds = array<i64: 1, 8, 256>}, {transform_indices = @transform_4, window_bounds = array<i64: 1, 8, 256>}]} {
    %c0_i32 = arith.constant 0 : i32
    %0 = arith.cmpi eq, %arg1, %c0_i32 : i32
    %1 = arith.extui %0 : i1 to i32
    %c0_i32_0 = arith.constant 0 : i32
    %2 = arith.cmpi ne, %1, %c0_i32_0 : i32
    scf.if %2 {
      %cst_22 = arith.constant 0.000000e+00 : f32
      %28 = vector.broadcast %cst_22 : f32 to vector<8x256xf32>
      %c0_23 = arith.constant 0 : index
      %c0_24 = arith.constant 0 : index
      %c0_25 = arith.constant 0 : index
      %29 = vector.load %arg4[%c0_23, %c0_24, %c0_25] : memref<1x8x256xf32, #tpu.memory_space<vmem>>, vector<1x8x256xf32>
      %30 = vector.shape_cast %29 : vector<1x8x256xf32> to vector<8x256xf32>
      %31 = vector.shape_cast %28 : vector<8x256xf32> to vector<1x8x256xf32>
      tpu.vector_store %arg4[%c0_23, %c0_24, %c0_25], %31 {strides = array<i32>} : memref<1x8x256xf32, #tpu.memory_space<vmem>>, vector<1x8x256xf32>,
      %cst_26 = arith.constant 0.000000e+00 : f32
      %32 = vector.broadcast %cst_26 : f32 to vector<8x256xf32>
      %c0_27 = arith.constant 0 : index
      %c0_28 = arith.constant 0 : index
      %c0_29 = arith.constant 0 : index
      %33 = vector.load %arg5[%c0_27, %c0_28, %c0_29] : memref<1x8x256xf32, #tpu.memory_space<vmem>>, vector<1x8x256xf32>
      %34 = vector.shape_cast %33 : vector<1x8x256xf32> to vector<8x256xf32>
      %35 = vector.shape_cast %32 : vector<8x256xf32> to vector<1x8x256xf32>
      tpu.vector_store %arg5[%c0_27, %c0_28, %c0_29], %35 {strides = array<i32>} : memref<1x8x256xf32, #tpu.memory_space<vmem>>, vector<1x8x256xf32>,
      %cst_30 = arith.constant 0.000000e+00 : f32
      %36 = vector.broadcast %cst_30 : f32 to vector<8x256xf32>
      %c0_31 = arith.constant 0 : index
      %c0_32 = arith.constant 0 : index
      %c0_33 = arith.constant 0 : index
      %37 = vector.load %arg6[%c0_31, %c0_32, %c0_33] : memref<1x8x256xf32, #tpu.memory_space<vmem>>, vector<1x8x256xf32>
      %38 = vector.shape_cast %37 : vector<1x8x256xf32> to vector<8x256xf32>
      %39 = vector.shape_cast %36 : vector<8x256xf32> to vector<1x8x256xf32>
      tpu.vector_store %arg6[%c0_31, %c0_32, %c0_33], %39 {strides = array<i32>} : memref<1x8x256xf32, #tpu.memory_space<vmem>>, vector<1x8x256xf32>,
    } else {
    }
    %cst = arith.constant 0.000000e+00 : f32
    %3 = vector.broadcast %cst : f32 to vector<8x256xf32>
    %c0 = arith.constant 0 : index
    %c0_1 = arith.constant 0 : index
    %4 = vector.load %arg2[%c0, %c0_1] : memref<8x256xf32, #tpu.memory_space<vmem>>, vector<8x256xf32>
    %c0_2 = arith.constant 0 : index
    %c0_3 = arith.constant 0 : index
    %5 = vector.load %arg3[%c0_2, %c0_3] : memref<8x256xf32, #tpu.memory_space<vmem>>, vector<8x256xf32>
    %6 = arith.mulf %4, %5 : vector<8x256xf32>
    %7 = arith.addf %3, %6 : vector<8x256xf32>
    %8 = arith.addf %3, %4 : vector<8x256xf32>
    %9 = arith.addf %3, %5 : vector<8x256xf32>
    %c0_4 = arith.constant 0 : index
    %c0_5 = arith.constant 0 : index
    %c0_6 = arith.constant 0 : index
    %10 = vector.load %arg4[%c0_4, %c0_5, %c0_6] : memref<1x8x256xf32, #tpu.memory_space<vmem>>, vector<1x8x256xf32>
    %11 = vector.shape_cast %10 : vector<1x8x256xf32> to vector<8x256xf32>
    %12 = arith.addf %11, %7 : vector<8x256xf32>
    %c0_7 = arith.constant 0 : index
    %c0_8 = arith.constant 0 : index
    %c0_9 = arith.constant 0 : index
    %13 = vector.load %arg4[%c0_7, %c0_8, %c0_9] : memref<1x8x256xf32, #tpu.memory_space<vmem>>, vector<1x8x256xf32>
    %14 = vector.shape_cast %13 : vector<1x8x256xf32> to vector<8x256xf32>
    %15 = vector.shape_cast %12 : vector<8x256xf32> to vector<1x8x256xf32>
    tpu.vector_store %arg4[%c0_7, %c0_8, %c0_9], %15 {strides = array<i32>} : memref<1x8x256xf32, #tpu.memory_space<vmem>>, vector<1x8x256xf32>,
    %c0_10 = arith.constant 0 : index
    %c0_11 = arith.constant 0 : index
    %c0_12 = arith.constant 0 : index
    %16 = vector.load %arg5[%c0_10, %c0_11, %c0_12] : memref<1x8x256xf32, #tpu.memory_space<vmem>>, vector<1x8x256xf32>
    %17 = vector.shape_cast %16 : vector<1x8x256xf32> to vector<8x256xf32>
    %18 = arith.addf %17, %8 : vector<8x256xf32>
    %c0_13 = arith.constant 0 : index
    %c0_14 = arith.constant 0 : index
    %c0_15 = arith.constant 0 : index
    %19 = vector.load %arg5[%c0_13, %c0_14, %c0_15] : memref<1x8x256xf32, #tpu.memory_space<vmem>>, vector<1x8x256xf32>
    %20 = vector.shape_cast %19 : vector<1x8x256xf32> to vector<8x256xf32>
    %21 = vector.shape_cast %18 : vector<8x256xf32> to vector<1x8x256xf32>
    tpu.vector_store %arg5[%c0_13, %c0_14, %c0_15], %21 {strides = array<i32>} : memref<1x8x256xf32, #tpu.memory_space<vmem>>, vector<1x8x256xf32>,
    %c0_16 = arith.constant 0 : index
    %c0_17 = arith.constant 0 : index
    %c0_18 = arith.constant 0 : index
    %22 = vector.load %arg6[%c0_16, %c0_17, %c0_18] : memref<1x8x256xf32, #tpu.memory_space<vmem>>, vector<1x8x256xf32>
    %23 = vector.shape_cast %22 : vector<1x8x256xf32> to vector<8x256xf32>
    %24 = arith.addf %23, %9 : vector<8x256xf32>
    %c0_19 = arith.constant 0 : index
    %c0_20 = arith.constant 0 : index
    %c0_21 = arith.constant 0 : index
    %25 = vector.load %arg6[%c0_19, %c0_20, %c0_21] : memref<1x8x256xf32, #tpu.memory_space<vmem>>, vector<1x8x256xf32>
    %26 = vector.shape_cast %25 : vector<1x8x256xf32> to vector<8x256xf32>
    %27 = vector.shape_cast %24 : vector<8x256xf32> to vector<1x8x256xf32>
    tpu.vector_store %arg6[%c0_19, %c0_20, %c0_21], %27 {strides = array<i32>} : memref<1x8x256xf32, #tpu.memory_space<vmem>>, vector<1x8x256xf32>,
    return
  }
  func.func @transform_0(%arg0: i32, %arg1: i32) -> (i32, i32) {
    %c0_i32 = arith.constant 0 : i32
    return %arg0, %arg1 : i32, i32
  }
  func.func @transform_1(%arg0: i32, %arg1: i32) -> (i32, i32) {
    %c0_i32 = arith.constant 0 : i32
    return %arg0, %arg1 : i32, i32
  }
  func.func @transform_2(%arg0: i32, %arg1: i32) -> (i32, i32, i32) {
    %c0_i32 = arith.constant 0 : i32
    %c0_i32_0 = arith.constant 0 : i32
    %c0_i32_1 = arith.constant 0 : i32
    return %arg0, %c0_i32, %c0_i32_0 : i32, i32, i32
  }
  func.func @transform_3(%arg0: i32, %arg1: i32) -> (i32, i32, i32) {
    %c0_i32 = arith.constant 0 : i32
    %c0_i32_0 = arith.constant 0 : i32
    %c0_i32_1 = arith.constant 0 : i32
    return %arg0, %c0_i32, %c0_i32_0 : i32, i32, i32
  }
  func.func @transform_4(%arg0: i32, %arg1: i32) -> (i32, i32, i32) {
    %c0_i32 = arith.constant 0 : i32
    %c0_i32_0 = arith.constant 0 : i32
    %c0_i32_1 = arith.constant 0 : i32
    return %arg0, %c0_i32, %c0_i32_0 : i32, i32, i32
  }
}

</mosaic_0001>

<llo_original>
// kernel: dice_loss.1
$region0: #{dice_loss.1}
  #allocation0 [shape = 'u32[]', space=smem, size = 0x4, offset = 0x4, fixed_abs, tag = 'smem constant byte address 0x4 - core index']
  #allocation1 [shape = 'u32[72,128]{1,0:T(1,128)}', space=vmem, size = 0x9000, scoped, tag = 'internal scratch']
  %s0 = inlined_call_operand.vmem [shape: f32[8,256], index: 0, kind: input, shape index: {}]
  %s1 = inlined_call_operand.vmem [shape: f32[8,256], index: 1, kind: input, shape index: {}]
  %s2 = inlined_call_operand.vmem [shape: f32[1,8,256], index: 2, kind: output, shape index: {0}]
  %s3 = inlined_call_operand.vmem [shape: f32[1,8,256], index: 3, kind: output, shape index: {1}]
  %s4 = inlined_call_operand.vmem [shape: f32[1,8,256], index: 4, kind: output, shape index: {2}]
  %5 = xla_tuple %s2, %s3, %s4
  %s6 = sld [smem:[#allocation0]]
  $region38: #{dice_loss.1} parent=0
    _
  %s8 = ssub.s32 1, %s6
  %s9 = scalar_select 0, %s8, %s6
  // Predicated region
  $region2: #{dice_loss.1} parent=0 // pred_check
    _
  $region3: #{dice_loss.1} parent=0 // pred_check_branch
    %11 = sbr.rel (0) target = $region5
  $region4: #{dice_loss.1} parent=0 // pred_region
    _
  $region5: #{dice_loss.1} parent=0 // pred_fallthru
    _
  // Predicated region
  $region6: #{dice_loss.1} parent=0 // pred_check
    _
  $region7: #{dice_loss.1} parent=0 // pred_check_branch
    %13 = sbr.rel (0) target = $region9
  $region8: #{dice_loss.1} parent=0 // pred_region
    _
  $region9: #{dice_loss.1} parent=0 // pred_fallthru
    _
  %p14 = scmp.eq.s32.totalorder 0, 0
  // Predicated region
  $region10: #{dice_loss.1} parent=0 // pred_check
    %p15 = pneg %p14
  $region11: #{dice_loss.1} parent=0 // pred_check_branch
    %17 = sbr.rel (%p15) target = $region13
  $region12: #{dice_loss.1} parent=0 // pred_region
    %18 = vst [vmem:[%s2] sm:$0xff] 0.0
    %19 = vst [vmem:[%s2 + $0x8] sm:$0xff] 0.0
    %20 = vst [vmem:[%s3] sm:$0xff] 0.0
    %21 = vst [vmem:[%s3 + $0x8] sm:$0xff] 0.0
    %22 = vst [vmem:[%s4] sm:$0xff] 0.0
    %23 = vst [vmem:[%s4 + $0x8] sm:$0xff] 0.0
  $region13: #{dice_loss.1} parent=0 // pred_fallthru
    _
  %v24 = vld [vmem:[%s0] sm:$0xff]
  %v25 = vld [vmem:[%s0 + $0x8] sm:$0xff]
  %v26 = vld [vmem:[%s1] sm:$0xff]
  %v27 = vld [vmem:[%s1 + $0x8] sm:$0xff]
  %v28 = vmul.f32 %v24, %v26
  %v29 = vmul.f32 %v25, %v27
  %v30 = vadd.f32 %v28, 0.0
  %v31 = vadd.f32 %v29, 0.0
  %v32 = vadd.f32 %v24, 0.0
  %v33 = vadd.f32 %v25, 0.0
  %v34 = vadd.f32 %v26, 0.0
  %v35 = vadd.f32 %v27, 0.0
  %v36 = vld [vmem:[%s2] sm:$0xff]
  %v37 = vld [vmem:[%s2 + $0x8] sm:$0xff]
  %v38 = vadd.f32 %v36, %v30
  %v39 = vadd.f32 %v37, %v31
  %40 = vst [vmem:[%s2] sm:$0xff] %v38
  %41 = vst [vmem:[%s2 + $0x8] sm:$0xff] %v39
  %v42 = vld [vmem:[%s3] sm:$0xff]
  %v43 = vld [vmem:[%s3 + $0x8] sm:$0xff]
  %v44 = vadd.f32 %v42, %v32
  %v45 = vadd.f32 %v43, %v33
  %46 = vst [vmem:[%s3] sm:$0xff] %v44
  %47 = vst [vmem:[%s3 + $0x8] sm:$0xff] %v45
  %v48 = vld [vmem:[%s4] sm:$0xff]
  %v49 = vld [vmem:[%s4 + $0x8] sm:$0xff]
  %v50 = vadd.f32 %v48, %v34
  %v51 = vadd.f32 %v49, %v35
  %52 = vst [vmem:[%s4] sm:$0xff] %v50
  %53 = vst [vmem:[%s4 + $0x8] sm:$0xff] %v51
  // Predicated region
  $region14: #{dice_loss.1} parent=0 // pred_check
    _
  $region15: #{dice_loss.1} parent=0 // pred_check_branch
    %55 = sbr.rel (0) target = $region17
  $region16: #{dice_loss.1} parent=0 // pred_region
    _
  $region17: #{dice_loss.1} parent=0 // pred_fallthru
    _
  // Predicated region
  $region18: #{dice_loss.1} parent=0 // pred_check
    _
  $region19: #{dice_loss.1} parent=0 // pred_check_branch
    %57 = sbr.rel (0) target = $region21
  $region20: #{dice_loss.1} parent=0 // pred_region
    _
  $region21: #{dice_loss.1} parent=0 // pred_fallthru
    _
  // Predicated region
  $region22: #{dice_loss.1} parent=0 // pred_check
    _
  $region23: #{dice_loss.1} parent=0 // pred_check_branch
    %59 = sbr.rel (0) target = $region25
  $region24: #{dice_loss.1} parent=0 // pred_region
    _
  $region25: #{dice_loss.1} parent=0 // pred_fallthru
    _
  // Predicated region
  $region26: #{dice_loss.1} parent=0 // pred_check
    _
  $region27: #{dice_loss.1} parent=0 // pred_check_branch
    %61 = sbr.rel (0) target = $region29
  $region28: #{dice_loss.1} parent=0 // pred_region
    _
  $region29: #{dice_loss.1} parent=0 // pred_fallthru
    _
  // Predicated region
  $region30: #{dice_loss.1} parent=0 // pred_check
    _
  $region31: #{dice_loss.1} parent=0 // pred_check_branch
    %63 = sbr.rel (0) target = $region33
  $region32: #{dice_loss.1} parent=0 // pred_region
    _
  $region33: #{dice_loss.1} parent=0 // pred_fallthru
    _
  // Predicated region
  $region34: #{dice_loss.1} parent=0 // pred_check
    _
  $region35: #{dice_loss.1} parent=0 // pred_check_branch
    %65 = sbr.rel (0) target = $region37
  $region36: #{dice_loss.1} parent=0 // pred_region
    _
  $region37: #{dice_loss.1} parent=0 // pred_fallthru
    _

</llo_original>
